<compile_context>
chip_gen: v5e
topology: v5e:2x2
jax: 0.10.0
libtpu: 0.0.40
codegen_flags: <defaults>
</compile_context>

<pallas_src>
import jax
import jax.numpy as jnp
from jax.experimental import pallas as pl
from jax.experimental.pallas import tpu as pltpu


def _bimul_kernel(w_ref, wt_ref, x_ref, o_ref):
    # w_ref  : (S, S)      resident VMEM tile (same block every grid step)
    # wt_ref : (S, S)      resident VMEM tile, w^T precomputed in the wrapper
    # x_ref  : (TB, S, S)  current batch tile
    # o_ref  : (TB, S, S)  current output tile
    tb, s, _ = x_ref.shape
    dt = x_ref.dtype

    w = w_ref[...]
    wt = wt_ref[...]
    x = x_ref[...]

    # Right multiply as one large MXU call: fold batch into the M dimension.
    #   Z[b] = X[b] @ w   ->   (TB*S, S) @ (S, S)
    z = jnp.dot(x.reshape(tb * s, s), w, preferred_element_type=jnp.float32)
    # Keep the second matmul at native MXU rate for low-precision inputs
    # (no-op for f32 inputs).
    z = z.astype(dt).reshape(tb, s, s)

    # Left multiply: Y[b] = w^T @ Z[b], batched matmul with the shared
    # (broadcast) transposed weight -- no transpose inside the kernel.
    wt_b = jnp.broadcast_to(wt.astype(dt), (tb, s, s))
    y = jax.lax.dot_general(
        wt_b, z,
        dimension_numbers=(((2,), (1,)), ((0,), (0,))),
        preferred_element_type=jnp.float32,
    )
    o_ref[...] = y.astype(o_ref.dtype)


def _pick_tb(n, s, itemsize):
    """Pick a batch tile size: big enough to amortize per-step overhead,
    small enough that double-buffered x/o blocks fit comfortably in VMEM
    on every generation (incl. v7x's 64 MiB)."""
    budget_bytes = 2 * 1024 * 1024          # ~2 MiB per x block
    tb = max(1, budget_bytes // (s * s * itemsize))
    tb = min(tb, 256)
    if n > 1:
        # Keep >= 2 grid steps so v7x's two TensorCores both get work.
        tb = min(tb, (n + 1) // 2)
    return int(min(tb, n))


def matrix_bimul(x, w, *, tb=None):
    """Compute Y[b] = w^T @ X[b] @ w for all b, via a Pallas TPU kernel."""
    n, s, s2 = x.shape
    assert s == s2 and w.shape == (s, s)

    if tb is None:
        tb = _pick_tb(n, s, jnp.dtype(x.dtype).itemsize)

    n_pad = ((n + tb - 1) // tb) * tb
    x_in = x if n_pad == n else jnp.pad(x, ((0, n_pad - n), (0, 0), (0, 0)))

    wt = w.T  # transpose once outside the kernel (w is a constant parameter)

    y = pl.pallas_call(
        _bimul_kernel,
        out_shape=jax.ShapeDtypeStruct((n_pad, s, s), x.dtype),
        grid_spec=pltpu.PrefetchScalarGridSpec(
            num_scalar_prefetch=0,
            grid=(n_pad // tb,),
            in_specs=[
                pl.BlockSpec((s, s), lambda b: (0, 0)),        # w   (resident)
                pl.BlockSpec((s, s), lambda b: (0, 0)),        # w^T (resident)
                pl.BlockSpec((tb, s, s), lambda b: (b, 0, 0)),  # x tile
            ],
            out_specs=pl.BlockSpec((tb, s, s), lambda b: (b, 0, 0)),
        ),
        compiler_params=pltpu.CompilerParams(
            dimension_semantics=("parallel",),
            vmem_limit_bytes=48 * 1024 * 1024,
        ),
    )(w, wt, x_in)

    if n_pad != n:
        y = y[:n]
    return y


def make_orthogonal(key, size, dtype=jnp.float32):
    """Deterministic stand-in for nn.init.orthogonal_: QR of a random matrix."""
    a = jax.random.normal(key, (size, size), dtype=jnp.float32)
    q, r = jnp.linalg.qr(a)
    q = q * jnp.sign(jnp.diag(r))[None, :]   # match torch's sign convention
    return q.astype(dtype)


if __name__ == "__main__":
    input_size = 32   # S
    batch = 5         # N (odd -> exercises batch padding + multi-step grid)

    key = jax.random.PRNGKey(0)
    k_w, k_x = jax.random.split(key)

    w = make_orthogonal(k_w, input_size)                       # (S, S)
    x = jax.random.normal(k_x, (batch, input_size, input_size),
                          dtype=jnp.float32)                   # (N, S, S)

    y = matrix_bimul(x, w)
    y = jax.block_until_ready(y)

    # Reference check in plain JAX.
    y_ref = jnp.einsum("ij,bjk,kl->bil", w.T, x, w)
    assert y.shape == (batch, input_size, input_size)
    assert jnp.allclose(y, y_ref, atol=1e-4, rtol=1e-4)

    print("KERNEL_OK")
</pallas_src>

<mosaic_0001>
module attributes {stable_mosaic.version = 11 : i64} {
  func.func @_bimul_kernel(%arg0: i32, %arg1: memref<32x32xf32, #tpu.memory_space<vmem>>, %arg2: memref<32x32xf32, #tpu.memory_space<vmem>>, %arg3: memref<3x32x32xf32, #tpu.memory_space<vmem>>, %arg4: memref<3x32x32xf32, #tpu.memory_space<vmem>>) attributes {dimension_semantics = [#tpu.dimension_semantics<parallel>], iteration_bounds = array<i64: 2>, scalar_prefetch = 0 : i64, scratch_operands = 0 : i64, tpu.core_type = #tpu.core_type<tc>, window_params = [{pipeline_mode = #tpu.pipeline_mode<synchronous>, transform_indices = @transform_0, window_bounds = array<i64: 32, 32>}, {pipeline_mode = #tpu.pipeline_mode<synchronous>, transform_indices = @transform_1, window_bounds = array<i64: 32, 32>}, {transform_indices = @transform_2, window_bounds = array<i64: 3, 32, 32>}, {transform_indices = @transform_3, window_bounds = array<i64: 3, 32, 32>}]} {
    %c0 = arith.constant 0 : index
    %c0_0 = arith.constant 0 : index
    %0 = vector.load %arg1[%c0, %c0_0] : memref<32x32xf32, #tpu.memory_space<vmem>>, vector<32x32xf32>
    %c0_1 = arith.constant 0 : index
    %c0_2 = arith.constant 0 : index
    %1 = vector.load %arg2[%c0_1, %c0_2] : memref<32x32xf32, #tpu.memory_space<vmem>>, vector<32x32xf32>
    %c0_3 = arith.constant 0 : index
    %c0_4 = arith.constant 0 : index
    %c0_5 = arith.constant 0 : index
    %2 = vector.load %arg3[%c0_3, %c0_4, %c0_5] : memref<3x32x32xf32, #tpu.memory_space<vmem>>, vector<3x32x32xf32>
    %3 = vector.shape_cast %2 : vector<3x32x32xf32> to vector<96x32xf32>
    %cst = arith.constant dense<0.000000e+00> : vector<96x32xf32>
    %4 = tpu.matmul %3, %0, %cst {dimension_numbers = #tpu.dot_dimension_numbers<[1], [0], [0], [1], [0, 0, 1, 1], [], []>} : vector<96x32xf32>, vector<32x32xf32>, vector<96x32xf32> -> vector<96x32xf32>
    %5 = vector.shape_cast %4 : vector<96x32xf32> to vector<3x32x32xf32>
    %6 = vector.shape_cast %1 : vector<32x32xf32> to vector<1x32x32xf32>
    %7 = vector.broadcast %6 : vector<1x32x32xf32> to vector<3x32x32xf32>
    %cst_6 = arith.constant dense<0.000000e+00> : vector<3x32x32xf32>
    %8 = tpu.matmul %7, %5, %cst_6 {dimension_numbers = #tpu.dot_dimension_numbers<[2], [1], [1], [2], [0, 0, 0, 1, 1, 2], [0], [0]>} : vector<3x32x32xf32>, vector<3x32x32xf32>, vector<3x32x32xf32> -> vector<3x32x32xf32>
    %c0_7 = arith.constant 0 : index
    %c0_8 = arith.constant 0 : index
    %c0_9 = arith.constant 0 : index
    %9 = vector.load %arg4[%c0_7, %c0_8, %c0_9] : memref<3x32x32xf32, #tpu.memory_space<vmem>>, vector<3x32x32xf32>
    tpu.vector_store %arg4[%c0_7, %c0_8, %c0_9], %8 {strides = array<i32>} : memref<3x32x32xf32, #tpu.memory_space<vmem>>, vector<3x32x32xf32>,
    return
  }
  func.func @transform_0(%arg0: i32) -> (i32, i32) {
    %c0_i32 = arith.constant 0 : i32
    %c0_i32_0 = arith.constant 0 : i32
    %c0_i32_1 = arith.constant 0 : i32
    return %c0_i32, %c0_i32_0 : i32, i32
  }
  func.func @transform_1(%arg0: i32) -> (i32, i32) {
    %c0_i32 = arith.constant 0 : i32
    %c0_i32_0 = arith.constant 0 : i32
    %c0_i32_1 = arith.constant 0 : i32
    return %c0_i32, %c0_i32_0 : i32, i32
  }
  func.func @transform_2(%arg0: i32) -> (i32, i32, i32) {
    %c0_i32 = arith.constant 0 : i32
    %c0_i32_0 = arith.constant 0 : i32
    %c0_i32_1 = arith.constant 0 : i32
    return %arg0, %c0_i32, %c0_i32_0 : i32, i32, i32
  }
  func.func @transform_3(%arg0: i32) -> (i32, i32, i32) {
    %c0_i32 = arith.constant 0 : i32
    %c0_i32_0 = arith.constant 0 : i32
    %c0_i32_1 = arith.constant 0 : i32
    return %arg0, %c0_i32, %c0_i32_0 : i32, i32, i32
  }
}

</mosaic_0001>

<llo_original>
// kernel: tpu_custom_call.1
$region0: #{tpu_custom_call.1}
  #allocation0 [shape = 'u32[]', space=smem, size = 0x4, offset = 0x4, fixed_abs, tag = 'smem constant byte address 0x4 - core index']
  #allocation1 [shape = 'u32[72,128]{1,0:T(1,128)}', space=vmem, size = 0x9000, scoped, tag = 'internal scratch']
  %s0 = inlined_call_operand.hbm [shape: f32[32,32], index: 0, kind: input, shape index: {}]
  %s1 = inlined_call_operand.hbm [shape: f32[32,32], index: 1, kind: input, shape index: {}]
  %s2 = inlined_call_operand.hbm [shape: f32[6,32,32], index: 2, kind: input, shape index: {}]
  %s3 = inlined_call_operand.hbm [shape: f32[6,32,32], index: 3, kind: output, shape index: {}]
  %s4 = sld [smem:[#allocation0]]
  $region57: #{tpu_custom_call.1} parent=0
    _
  %s6 = ssub.s32 1, %s4
  %s7 = scalar_select 0, %s6, %s4
  $region1: #{tpu_custom_call.1} parent=0
    #allocation2 [shape = 'u8[16384]{0}', space=vmem, size = 0x4000, scoped, tag = 'input window, operand 0, single buffered']
    #allocation3 [shape = 's32[2]{0}', space=sflag, size = 0x8, scoped, tag = 'scoped memory for tpu_custom_call.1']
    #allocation4 [shape = 's32[2]{0}', space=sflag, size = 0x8, scoped, tag = 'scoped memory for tpu_custom_call.1']
    #allocation5 [shape = 'u8[16384]{0}', space=vmem, size = 0x4000, scoped, tag = 'input window, operand 1, single buffered']
    #allocation6 [shape = 's32[1]{0}', space=sflag, size = 0x4, scoped, tag = 'scoped memory for tpu_custom_call.1']
    #allocation7 [shape = 'u8[98304]{0}', space=vmem, size = 0x18000, scoped, tag = 'input window, operand 2']
    #allocation8 [shape = 'u8[98304]{0}', space=vmem, size = 0x18000, scoped, tag = 'output window, operand 0']
    %8 = vsyncpa [#allocation3], 0
    %9 = vsyncpa [#allocation6], 0
    %10 = vsyncpa [#allocation4], 0
    %s11 = scalar_lea.sflag [#allocation4], 1
    %12 = vsyncpa %s11, 0
    loop: start=0, step=1, limit=4
    $region2: #{tpu_custom_call.1} parent=1 // loop_pre_header
      _
    $region3: #{tpu_custom_call.1} parent=1 // loop_header
      %s14 = sphi 0, %s18
      %p15 = scmp.ge.s32.totalorder %s14, 4
      %s22 = sphi 0, %s22
      %s24 = sphi 0, %s22
      %s25 = sphi 0, %s24
      %s39 = sphi 0, %s25
      %s43 = sphi 0, %s43
      %s45 = sphi 0, %s43
      %s46 = sphi 0, %s45
      %s60 = sphi 0, %s46
      %s66 = sphi 0, %s68
      %s69 = sphi 0, %s66
      %s70 = sphi 0, %s69
      %s86 = sphi 0, %s70
      %s92 = sphi 0, %s94
      %s95 = sphi 0, %s92
      %s96 = sphi 0, %s95
      %s112 = sphi 0, %s96
    $region4: #{tpu_custom_call.1} parent=1 // loop_header_branch
      %17 = sbr.rel (%p15) target = $region8
    $region5: #{tpu_custom_call.1} parent=1 // loop_body
      %s19 = ssub.s32 %s14, 1
      %s20 = ssub.s32 %s14, 2
      %s21 = sadd.s32 %s14, 1
      %s23 = sadd.s32 %s22, 1
      %p26 = scmp.eq.s32.totalorder %s14, 1
      %p27 = scmp.ne.s32.totalorder %s22, %s24
      %p28 = scmp.eq.s32.totalorder %s14, 0
      %p29 = por %p27, %p28
      %p30 = scmp.ne.s32.totalorder %s22, %s24
      %p31 = scmp.eq.s32.totalorder %s19, 1
      %p32 = por %p30, %p31
      %p33 = scmp.ne.s32.totalorder %s24, %s25
      %p34 = scmp.eq.s32.totalorder %s19, 0
      %p35 = por %p33, %p34
      %p36 = scmp.ne.s32.totalorder %s24, %s25
      %p37 = scmp.eq.s32.totalorder %s20, 1
      %p38 = por %p36, %p37
      %p40 = scmp.ne.s32.totalorder %s25, %s39
      %p41 = scmp.eq.s32.totalorder %s20, 0
      %p42 = por %p40, %p41
      %s44 = sadd.s32 %s43, 1
      %p47 = scmp.eq.s32.totalorder %s14, 1
      %p48 = scmp.ne.s32.totalorder %s43, %s45
      %p49 = scmp.eq.s32.totalorder %s14, 0
      %p50 = por %p48, %p49
      %p51 = scmp.ne.s32.totalorder %s43, %s45
      %p52 = scmp.eq.s32.totalorder %s19, 1
      %p53 = por %p51, %p52
      %p54 = scmp.ne.s32.totalorder %s45, %s46
      %p55 = scmp.eq.s32.totalorder %s19, 0
      %p56 = por %p54, %p55
      %p57 = scmp.ne.s32.totalorder %s45, %s46
      %p58 = scmp.eq.s32.totalorder %s20, 1
      %p59 = por %p57, %p58
      %p61 = scmp.ne.s32.totalorder %s46, %s60
      %p62 = scmp.eq.s32.totalorder %s20, 0
      %p63 = por %p61, %p62
      %s64 = ssub.s32 %s14, %s21
      %p65 = scmp.eq.s32.totalorder %s64, 0
      %s67 = sadd.s32 %s66, 1
      %s68 = scalar_select %p65, %s66, %s67
      %p71 = pneg %p65
      %p72 = scmp.eq.s32.totalorder %s14, 1
      %p73 = por %p71, %p72
      %p74 = scmp.ne.s32.totalorder %s66, %s69
      %p75 = scmp.eq.s32.totalorder %s14, 0
      %p76 = por %p74, %p75
      %p77 = scmp.ne.s32.totalorder %s66, %s69
      %p78 = scmp.eq.s32.totalorder %s19, 1
      %p79 = por %p77, %p78
      %p80 = scmp.ne.s32.totalorder %s69, %s70
      %p81 = scmp.eq.s32.totalorder %s19, 0
      %p82 = por %p80, %p81
      %p83 = scmp.ne.s32.totalorder %s69, %s70
      %p84 = scmp.eq.s32.totalorder %s20, 1
      %p85 = por %p83, %p84
      %p87 = scmp.ne.s32.totalorder %s70, %s86
      %p88 = scmp.eq.s32.totalorder %s20, 0
      %p89 = por %p87, %p88
      %s90 = ssub.s32 %s14, %s21
      %p91 = scmp.eq.s32.totalorder %s90, 0
      %s93 = sadd.s32 %s92, 1
      %s94 = scalar_select %p91, %s92, %s93
      %p97 = pneg %p91
      %p98 = scmp.eq.s32.totalorder %s14, 1
      %p99 = por %p97, %p98
      %p100 = scmp.ne.s32.totalorder %s92, %s95
      %p101 = scmp.eq.s32.totalorder %s14, 0
      %p102 = por %p100, %p101
      %p103 = scmp.ne.s32.totalorder %s92, %s95
      %p104 = scmp.eq.s32.totalorder %s19, 1
      %p105 = por %p103, %p104
      %p106 = scmp.ne.s32.totalorder %s95, %s96
      %p107 = scmp.eq.s32.totalorder %s19, 0
      %p108 = por %p106, %p107
      %p109 = scmp.ne.s32.totalorder %s95, %s96
      %p110 = scmp.eq.s32.totalorder %s20, 1
      %p111 = por %p109, %p110
      %p113 = scmp.ne.s32.totalorder %s96, %s112
      %p114 = scmp.eq.s32.totalorder %s20, 0
      %p115 = por %p113, %p114
      %p116 = scmp.le.s32.totalorder 1, %s14
      %p117 = scmp.lt.s32.totalorder %s14, 3
      %p118 = pnand %p116, %p117
      %p119 = pneg %p118
      // Predicated region
      $region9: #{tpu_custom_call.1} parent=5 // pred_check
        _
      $region10: #{tpu_custom_call.1} parent=5 // pred_check_branch
        %121 = sbr.rel (%p118) target = $region12
      $region11: #{tpu_custom_call.1} parent=5 // pred_region
        %s122 = ssub.s32 %s14, 1
        // Predicated region
        $region13: #{tpu_custom_call.1} parent=11 // pred_check
          %p123 = pneg %p35
        $region14: #{tpu_custom_call.1} parent=11 // pred_check_branch
          %125 = sbr.rel (%p123) target = $region16
        $region15: #{tpu_custom_call.1} parent=11 // pred_region
          %127 = vsyncadd [#allocation3], 0
          %s128 = sshll.u32 %s0, 4
          %s129 = int_to_ptr.hbm [resolvable:$true] %s128
          %s130 = sshll.u32 [#allocation2], 4
          %s131 = int_to_ptr.vmem [resolvable:$true] %s130
          %136 = dma.hbm_to_vmem [thread:$0]  %s129, 512, %s131, [#allocation3], 128, 128, 8
        $region16: #{tpu_custom_call.1} parent=11 // pred_fallthru
          _
        // Predicated region
        $region17: #{tpu_custom_call.1} parent=11 // pred_check
          %p137 = pneg %p56
        $region18: #{tpu_custom_call.1} parent=11 // pred_check_branch
          %139 = sbr.rel (%p137) target = $region20
        $region19: #{tpu_custom_call.1} parent=11 // pred_region
          %141 = vsyncadd [#allocation6], 0
          %s142 = sshll.u32 %s1, 4
          %s143 = int_to_ptr.hbm [resolvable:$true] %s142
          %s144 = sshll.u32 [#allocation5], 4
          %s145 = int_to_ptr.vmem [resolvable:$true] %s144
          %150 = dma.hbm_to_vmem [thread:$0]  %s143, 512, %s145, [#allocation6], 128, 128, 8
        $region20: #{tpu_custom_call.1} parent=11 // pred_fallthru
          _
      $region12: #{tpu_custom_call.1} parent=5 // pred_fallthru
        _
      %p151 = scmp.lt.s32.totalorder %s14, 2
      // Predicated region
      $region21: #{tpu_custom_call.1} parent=5 // pred_check
        %p152 = pneg %p151
      $region22: #{tpu_custom_call.1} parent=5 // pred_check_branch
        %154 = sbr.rel (%p152) target = $region24
      $region23: #{tpu_custom_call.1} parent=5 // pred_region
        // Predicated region
        $region25: #{tpu_custom_call.1} parent=23 // pred_check
          %p155 = pneg %p76
        $region26: #{tpu_custom_call.1} parent=23 // pred_check_branch
          %157 = sbr.rel (%p155) target = $region28
        $region27: #{tpu_custom_call.1} parent=23 // pred_region
          %s158 = sand.u32 %s14, 1
          %s159 = scalar_lea.sflag [#allocation3], %s158
          %s160 = sand.u32 %s66, 1
          %s161 = smul.addr %s160, 96
          %s162 = scalar_lea.vmem [#allocation7], %s161
          %s163 = smul.u32 3, %s14
          %165 = vsyncadd %s159, 0
          %s166 = smul.addr %s163, 4
          %s167 = smul.addr %s166, 8
          %s168 = scalar_lea.hbm %s2, %s167
          %s169 = sshll.u32 %s168, 4
          %s170 = int_to_ptr.hbm [resolvable:$true] %s169
          %s171 = sshll.u32 %s162, 4
          %s172 = int_to_ptr.vmem [resolvable:$true] %s171
          %177 = dma.hbm_to_vmem [thread:$0]  %s170, 1536, %s172, %s159, 128, 128, 8
        $region28: #{tpu_custom_call.1} parent=23 // pred_fallthru
          _
      $region24: #{tpu_custom_call.1} parent=5 // pred_fallthru
        _
      %p178 = scmp.le.s32.totalorder 1, %s14
      %p179 = scmp.lt.s32.totalorder %s14, 3
      %p180 = pnand %p178, %p179
      %p181 = pneg %p180
      // Predicated region
      $region29: #{tpu_custom_call.1} parent=5 // pred_check
        _
      $region30: #{tpu_custom_call.1} parent=5 // pred_check_branch
        %183 = sbr.rel (%p180) target = $region32
      $region31: #{tpu_custom_call.1} parent=5 // pred_region
        %s184 = ssub.s32 %s14, 1
        // Predicated region
        $region33: #{tpu_custom_call.1} parent=31 // pred_check
          %p185 = pneg %p35
        $region34: #{tpu_custom_call.1} parent=31 // pred_check_branch
          %187 = sbr.rel (%p185) target = $region36
        $region35: #{tpu_custom_call.1} parent=31 // pred_region
          %189 = dma.done [#allocation3], 512
        $region36: #{tpu_custom_call.1} parent=31 // pred_fallthru
          _
        // Predicated region
        $region37: #{tpu_custom_call.1} parent=31 // pred_check
          %p190 = pneg %p56
        $region38: #{tpu_custom_call.1} parent=31 // pred_check_branch
          %192 = sbr.rel (%p190) target = $region40
        $region39: #{tpu_custom_call.1} parent=31 // pred_region
          %194 = dma.done [#allocation6], 512
        $region40: #{tpu_custom_call.1} parent=31 // pred_fallthru
          _
        %s195 = sand.u32 %s19, 1
        %s196 = scalar_lea.sflag [#allocation3], %s195
        %s197 = sand.u32 %s69, 1
        %s198 = smul.addr %s197, 96
        %s199 = scalar_lea.vmem [#allocation7], %s198
        // Predicated region
        $region41: #{tpu_custom_call.1} parent=31 // pred_check
          %p200 = pneg %p82
        $region42: #{tpu_custom_call.1} parent=31 // pred_check_branch
          %202 = sbr.rel (%p200) target = $region44
        $region43: #{tpu_custom_call.1} parent=31 // pred_region
          %204 = dma.done %s196, 1536
        $region44: #{tpu_custom_call.1} parent=31 // pred_fallthru
          _
        %p205 = pneg %p35
        %p206 = pneg %p32
        %p207 = pneg %p56
        %p208 = pneg %p53
        %s209 = sand.u32 %s19, 1
        %s210 = scalar_lea.sflag [#allocation3], %s209
        %s211 = sand.u32 %s69, 1
        %s212 = smul.addr %s211, 96
        %s213 = scalar_lea.vmem [#allocation7], %s212
        %p214 = pneg %p82
        %p215 = pneg %p79
        %p216 = pneg %p108
        %p217 = pneg %p105
        %s218 = sand.u32 %s95, 1
        %s219 = scalar_lea.sflag [#allocation4], %s218
        %s220 = sand.u32 %s95, 1
        %s221 = smul.addr %s220, 96
        %s222 = scalar_lea.vmem [#allocation8], %s221
        %s223 = smul.u32 3, %s19
        %s224 = smul.u32 3, %s19
        %v225 = vld [vmem:[#allocation2] sm:$0xff]
        %v226 = vld [vmem:[#allocation2 + $0x8] sm:$0xff]
        %v227 = vld [vmem:[#allocation2 + $0x10] sm:$0xff]
        %v228 = vld [vmem:[#allocation2 + $0x18] sm:$0xff]
        %v229 = vld [vmem:[#allocation5] sm:$0xff]
        %v230 = vld [vmem:[#allocation5 + $0x8] sm:$0xff]
        %v231 = vld [vmem:[#allocation5 + $0x10] sm:$0xff]
        %v232 = vld [vmem:[#allocation5 + $0x18] sm:$0xff]
        %v233 = vld [vmem:[%s199] sm:$0xff]
        %v234 = vld [vmem:[%s199 + $0x8] sm:$0xff]
        %v235 = vld [vmem:[%s199 + $0x10] sm:$0xff]
        %v236 = vld [vmem:[%s199 + $0x18] sm:$0xff]
        %v237 = vld [vmem:[%s199 + $0x20] sm:$0xff]
        %v238 = vld [vmem:[%s199 + $0x28] sm:$0xff]
        %v239 = vld [vmem:[%s199 + $0x30] sm:$0xff]
        %v240 = vld [vmem:[%s199 + $0x38] sm:$0xff]
        %v241 = vld [vmem:[%s199 + $0x40] sm:$0xff]
        %v242 = vld [vmem:[%s199 + $0x48] sm:$0xff]
        %v243 = vld [vmem:[%s199 + $0x50] sm:$0xff]
        %v244 = vld [vmem:[%s199 + $0x58] sm:$0xff]
        %vm245 = vcmask 261120
        %v247 = vsel %vm245, %v233, 0
        %v250 = vsel %vm245, %v234, 0
        %v253 = vsel %vm245, %v235, 0
        %v256 = vsel %vm245, %v236, 0
        %v259 = vsel %vm245, %v237, 0
        %v262 = vsel %vm245, %v238, 0
        %v265 = vsel %vm245, %v239, 0
        %v268 = vsel %vm245, %v240, 0
        %v271 = vsel %vm245, %v241, 0
        %v274 = vsel %vm245, %v242, 0
        %v277 = vsel %vm245, %v243, 0
        %v280 = vsel %vm245, %v244, 0
        %282 = vmatpush.msra.mxu0 0.0
        %283 = vmatpush.msra.mxu0 0.0
        %284 = vmatpush.msra.mxu0 0.0
        %285 = vmatpush.msra.mxu0 0.0
        %286 = vmatpush.msra.mxu0 0.0
        %287 = vmatpush.msra.mxu0 0.0
        %288 = vmatpush.msra.mxu0 0.0
        %289 = vmatpush.msra.mxu0 0.0
        %290 = vmatpush.msra.mxu0 0.0
        %291 = vmatpush.msra.mxu0 0.0
        %292 = vmatpush.msra.mxu0 0.0
        %293 = vmatpush.msra.mxu0 0.0
        %294 = vmatpush.msra.mxu0 %v228
        %295 = vmatpush.msra.mxu0 %v227
        %296 = vmatpush.msra.mxu0 %v226
        %297 = vmatpush.msra.mxu0 %v225
        %298 = vmatmul.f32.gmra.mxu0 %v247
        %v299 = vpop.f32.mrf.mxu0
        %v300 = vadd.f32 0.0, %v299
        %301 = vmatmul.f32.gmra.mxu0 %v250
        %v302 = vpop.f32.mrf.mxu0
        %v303 = vadd.f32 0.0, %v302
        %304 = vmatmul.f32.gmra.mxu0 %v253
        %v305 = vpop.f32.mrf.mxu0
        %v306 = vadd.f32 0.0, %v305
        %307 = vmatmul.f32.gmra.mxu0 %v256
        %v308 = vpop.f32.mrf.mxu0
        %v309 = vadd.f32 0.0, %v308
        %310 = vmatmul.f32.gmra.mxu0 %v259
        %v311 = vpop.f32.mrf.mxu0
        %v312 = vadd.f32 0.0, %v311
        %313 = vmatmul.f32.gmra.mxu0 %v262
        %v314 = vpop.f32.mrf.mxu0
        %v315 = vadd.f32 0.0, %v314
        %316 = vmatmul.f32.gmra.mxu0 %v265
        %v317 = vpop.f32.mrf.mxu0
        %v318 = vadd.f32 0.0, %v317
        %319 = vmatmul.f32.gmra.mxu0 %v268
        %v320 = vpop.f32.mrf.mxu0
        %v321 = vadd.f32 0.0, %v320
        %322 = vmatmul.f32.gmra.mxu0 %v271
        %v323 = vpop.f32.mrf.mxu0
        %v324 = vadd.f32 0.0, %v323
        %325 = vmatmul.f32.gmra.mxu0 %v274
        %v326 = vpop.f32.mrf.mxu0
        %v327 = vadd.f32 0.0, %v326
        %328 = vmatmul.f32.gmra.mxu0 %v277
        %v329 = vpop.f32.mrf.mxu0
        %v330 = vadd.f32 0.0, %v329
        %331 = vmatmul.f32.gmra.mxu0 %v280
        %v332 = vpop.f32.mrf.mxu0
        %v333 = vadd.f32 0.0, %v332
        %334 = vdwg.mxu0
        %v336 = vsel %vm245, %v229, 0
        %v339 = vsel %vm245, %v230, 0
        %v342 = vsel %vm245, %v231, 0
        %v345 = vsel %vm245, %v232, 0
        %347 = vmatpush.msra.mxu0 0.0
        %348 = vmatpush.msra.mxu0 0.0
        %349 = vmatpush.msra.mxu0 0.0
        %350 = vmatpush.msra.mxu0 0.0
        %351 = vmatpush.msra.mxu0 0.0
        %352 = vmatpush.msra.mxu0 0.0
        %353 = vmatpush.msra.mxu0 0.0
        %354 = vmatpush.msra.mxu0 0.0
        %355 = vmatpush.msra.mxu0 0.0
        %356 = vmatpush.msra.mxu0 0.0
        %357 = vmatpush.msra.mxu0 0.0
        %358 = vmatpush.msra.mxu0 0.0
        %359 = vmatpush.msra.mxu0 %v309
        %360 = vmatpush.msra.mxu0 %v306
        %361 = vmatpush.msra.mxu0 %v303
        %362 = vmatpush.msra.mxu0 %v300
        %363 = vmatmul.f32.gmra.mxu0 %v336
        %v364 = vpop.f32.mrf.mxu0
        %v365 = vadd.f32 0.0, %v364
        %366 = vmatmul.f32.gmra.mxu0 %v339
        %v367 = vpop.f32.mrf.mxu0
        %v368 = vadd.f32 0.0, %v367
        %369 = vmatmul.f32.gmra.mxu0 %v342
        %v370 = vpop.f32.mrf.mxu0
        %v371 = vadd.f32 0.0, %v370
        %372 = vmatmul.f32.gmra.mxu0 %v345
        %v373 = vpop.f32.mrf.mxu0
        %v374 = vadd.f32 0.0, %v373
        %375 = vdwg.mxu0
        %376 = vmatpush.msra.mxu0 0.0
        %377 = vmatpush.msra.mxu0 0.0
        %378 = vmatpush.msra.mxu0 0.0
        %379 = vmatpush.msra.mxu0 0.0
        %380 = vmatpush.msra.mxu0 0.0
        %381 = vmatpush.msra.mxu0 0.0
        %382 = vmatpush.msra.mxu0 0.0
        %383 = vmatpush.msra.mxu0 0.0
        %384 = vmatpush.msra.mxu0 0.0
        %385 = vmatpush.msra.mxu0 0.0
        %386 = vmatpush.msra.mxu0 0.0
        %387 = vmatpush.msra.mxu0 0.0
        %388 = vmatpush.msra.mxu0 %v321
        %389 = vmatpush.msra.mxu0 %v318
        %390 = vmatpush.msra.mxu0 %v315
        %391 = vmatpush.msra.mxu0 %v312
        %392 = vmatmul.f32.gmra.mxu0 %v336
        %v393 = vpop.f32.mrf.mxu0
        %v394 = vadd.f32 0.0, %v393
        %395 = vmatmul.f32.gmra.mxu0 %v339
        %v396 = vpop.f32.mrf.mxu0
        %v397 = vadd.f32 0.0, %v396
        %398 = vmatmul.f32.gmra.mxu0 %v342
        %v399 = vpop.f32.mrf.mxu0
        %v400 = vadd.f32 0.0, %v399
        %401 = vmatmul.f32.gmra.mxu0 %v345
        %v402 = vpop.f32.mrf.mxu0
        %v403 = vadd.f32 0.0, %v402
        %404 = vdwg.mxu0
        %405 = vmatpush.msra.mxu0 0.0
        %406 = vmatpush.msra.mxu0 0.0
        %407 = vmatpush.msra.mxu0 0.0
        %408 = vmatpush.msra.mxu0 0.0
        %409 = vmatpush.msra.mxu0 0.0
        %410 = vmatpush.msra.mxu0 0.0
        %411 = vmatpush.msra.mxu0 0.0
        %412 = vmatpush.msra.mxu0 0.0
        %413 = vmatpush.msra.mxu0 0.0
        %414 = vmatpush.msra.mxu0 0.0
        %415 = vmatpush.msra.mxu0 0.0
        %416 = vmatpush.msra.mxu0 0.0
        %417 = vmatpush.msra.mxu0 %v333
        %418 = vmatpush.msra.mxu0 %v330
        %419 = vmatpush.msra.mxu0 %v327
        %420 = vmatpush.msra.mxu0 %v324
        %421 = vmatmul.f32.gmra.mxu0 %v336
        %v422 = vpop.f32.mrf.mxu0
        %v423 = vadd.f32 0.0, %v422
        %424 = vmatmul.f32.gmra.mxu0 %v339
        %v425 = vpop.f32.mrf.mxu0
        %v426 = vadd.f32 0.0, %v425
        %427 = vmatmul.f32.gmra.mxu0 %v342
        %v428 = vpop.f32.mrf.mxu0
        %v429 = vadd.f32 0.0, %v428
        %430 = vmatmul.f32.gmra.mxu0 %v345
        %v431 = vpop.f32.mrf.mxu0
        %v432 = vadd.f32 0.0, %v431
        %433 = vdwg.mxu0
        %434 = vst.msk [vmem:[%s222] sm:$0xff] %vm245, %v365
        %435 = vst.msk [vmem:[%s222 + $0x8] sm:$0xff] %vm245, %v368
        %436 = vst.msk [vmem:[%s222 + $0x10] sm:$0xff] %vm245, %v371
        %437 = vst.msk [vmem:[%s222 + $0x18] sm:$0xff] %vm245, %v374
        %438 = vst.msk [vmem:[%s222 + $0x20] sm:$0xff] %vm245, %v394
        %439 = vst.msk [vmem:[%s222 + $0x28] sm:$0xff] %vm245, %v397
        %440 = vst.msk [vmem:[%s222 + $0x30] sm:$0xff] %vm245, %v400
        %441 = vst.msk [vmem:[%s222 + $0x38] sm:$0xff] %vm245, %v403
        %442 = vst.msk [vmem:[%s222 + $0x40] sm:$0xff] %vm245, %v423
        %443 = vst.msk [vmem:[%s222 + $0x48] sm:$0xff] %vm245, %v426
        %444 = vst.msk [vmem:[%s222 + $0x50] sm:$0xff] %vm245, %v429
        %445 = vst.msk [vmem:[%s222 + $0x58] sm:$0xff] %vm245, %v432
        %s446 = sand.u32 %s95, 1
        %s447 = scalar_lea.sflag [#allocation4], %s446
        %s448 = sand.u32 %s95, 1
        %s449 = smul.addr %s448, 96
        %s450 = scalar_lea.vmem [#allocation8], %s449
        // Predicated region
        $region45: #{tpu_custom_call.1} parent=31 // pred_check
          %p451 = pneg %p105
        $region46: #{tpu_custom_call.1} parent=31 // pred_check_branch
          %453 = sbr.rel (%p451) target = $region48
        $region47: #{tpu_custom_call.1} parent=31 // pred_region
          %s454 = smul.u32 3, %s19
          %456 = vsyncadd %s447, 0
          %s457 = smul.addr %s454, 4
          %s458 = smul.addr %s457, 8
          %s459 = scalar_lea.hbm %s3, %s458
          %s460 = sshll.u32 %s450, 4
          %s461 = int_to_ptr.vmem [resolvable:$true] %s460
          %s462 = sshll.u32 %s459, 4
          %s463 = int_to_ptr.hbm [resolvable:$true] %s462
          %468 = dma.vmem_to_hbm [thread:$0]  %s461, 1536, %s463, %s447, 128, 128, 8
        $region48: #{tpu_custom_call.1} parent=31 // pred_fallthru
          _
      $region32: #{tpu_custom_call.1} parent=5 // pred_fallthru
        _
      %p469 = scmp.le.s32.totalorder 2, %s14
      // Predicated region
      $region49: #{tpu_custom_call.1} parent=5 // pred_check
        %p470 = pneg %p469
      $region50: #{tpu_custom_call.1} parent=5 // pred_check_branch
        %472 = sbr.rel (%p470) target = $region52
      $region51: #{tpu_custom_call.1} parent=5 // pred_region
        %s473 = ssub.s32 %s14, 2
        // Predicated region
        $region53: #{tpu_custom_call.1} parent=51 // pred_check
          %p474 = pneg %p111
        $region54: #{tpu_custom_call.1} parent=51 // pred_check_branch
          %476 = sbr.rel (%p474) target = $region56
        $region55: #{tpu_custom_call.1} parent=51 // pred_region
          %s477 = sand.u32 %s96, 1
          %s478 = scalar_lea.sflag [#allocation4], %s477
          %s479 = sand.u32 %s96, 1
          %s480 = smul.addr %s479, 96
          %s481 = scalar_lea.vmem [#allocation8], %s480
          %483 = dma.done %s478, 1536
        $region56: #{tpu_custom_call.1} parent=51 // pred_fallthru
          _
      $region52: #{tpu_custom_call.1} parent=5 // pred_fallthru
        _
    $region6: #{tpu_custom_call.1} parent=1 // loop_footer
      %s18 = sadd.s32 1, %s14
    $region7: #{tpu_custom_call.1} parent=1 // loop_footer_branch
      %13 = sbr.rel target = $region3
    $region8: #{tpu_custom_call.1} parent=1 // loop_exit
      _
    %484 = vsyncpa [#allocation3], 1
    %s485 = scalar_lea.sflag [#allocation3], 1
    %486 = vsyncpa %s485, 1
    %487 = vsyncpa [#allocation6], 1
    %488 = vsyncpa [#allocation4], 1
    %s489 = scalar_lea.sflag [#allocation4], 1
    %490 = vsyncpa %s489, 1

</llo_original>
